<compile_context>
chip_gen: v5e
topology: v5e:2x2
jax: 0.10.0
libtpu: 0.0.40
codegen_flags: <defaults>
</compile_context>

<pallas_src>
import jax
import jax.numpy as jnp
from jax.experimental import pallas as pl
from jax.experimental.pallas import tpu as pltpu

LN_EPS = 1e-5  # torch.nn.LayerNorm default


# ------------------------------- helpers ------------------------------------
def _round_up(n, m):
    return ((n + m - 1) // m) * m


def _sublane(dtype):
    return 8 if jnp.dtype(dtype).itemsize >= 4 else 16


def _vmem_phys_bytes():
    """Physical VMEM per TensorCore: 64 MiB on v7x, 128 MiB on v5e/v6e."""
    try:
        kind = jax.devices()[0].device_kind.lower()
    except Exception:
        kind = ""
    if "7" in kind:           # v7x: 2 TCs/chip, 64 MiB VMEM each
        return 64 << 20
    return 128 << 20


def _col_tile(n, max_tile=512):
    # Prefer 512-wide tiles (amortize grid-step overhead; feeds v6e/v7x MXU),
    # then 256 (2x256^2 MXU), then 128 (v5e MXU), else the full dim (keeps the
    # (8,128) BlockSpec rule satisfied and K-accumulation exact).
    for t in (512, 256, 128):
        if t <= max_tile and n % t == 0:
            return t
    return n
# TODO(synk): for dim < 128 (like the toy test) output stores are masked
# (vst.msk); benchmark/tune only with real ViT dims (>= 128 lanes).


def _fused_tiles(rows, d_in, d_out, x_dtype, mm_dtype, out_dtype):
    """Pick (tm, tn, vmem_limit) for the fused LN+Linear kernel."""
    phys = _vmem_phys_bytes()
    sub = _sublane(x_dtype)
    x_sz = jnp.dtype(x_dtype).itemsize
    mm_sz = jnp.dtype(mm_dtype).itemsize
    o_sz = jnp.dtype(out_dtype).itemsize

    # Keep the whole weight resident (constant index_map => DMA'd once) when
    # it comfortably fits: <= 4 MiB on v7x, <= 8 MiB on v5e/v6e.
    w_limit = (4 << 20) if phys <= (64 << 20) else (8 << 20)
    w_resident = d_in * d_out * mm_sz <= w_limit
    tn = d_out if w_resident else _col_tile(d_out)

    # Working-set target well under physical VMEM (leaves compiler headroom).
    target = min(phys // 2, 48 << 20)
    fixed = 2 * d_in * tn * mm_sz + 2 * tn * 4 + 4 * d_in * 4   # W, bias, g, b bufs
    per_row = 2 * d_in * x_sz + d_in * mm_sz + 2 * tn * o_sz    # x bufs, xn, out bufs
    avail = max(target - fixed, 1 << 20)
    tm_cap = max(avail // per_row, sub)

    want = 512 if x_sz >= 4 else 1024
    tm = min(want, tm_cap)
    tm = min(_round_up(tm, sub), _round_up(rows, sub))
    # Give v7x's two TensorCores at least two row tiles when rows allow.
    if pl.cdiv(rows, tm) < 2 and rows > 2 * sub:
        tm = _round_up(pl.cdiv(rows, 2), sub)

    work = fixed + tm * per_row
    vmem_limit = int(min(phys, max(work + (4 << 20), 32 << 20)))
    return tm, tn, vmem_limit


def _ln_tiles(rows, dim, dtype, want=None):
    """Pick (tr, vmem_limit) for the standalone LayerNorm kernel."""
    phys = _vmem_phys_bytes()
    sub = _sublane(dtype)
    sz = jnp.dtype(dtype).itemsize
    target = min(phys // 4, 32 << 20)
    per_row = 4 * dim * sz + 2 * dim * 4      # 2x in + 2x out bufs + f32 headroom
    tr_cap = max(target // per_row, sub)
    if want is None:
        want = 512 if sz >= 4 else 1024
    tr = min(want, tr_cap)
    tr = min(_round_up(tr, sub), _round_up(rows, sub))
    if pl.cdiv(rows, tr) < 2 and rows > 2 * sub:
        tr = _round_up(pl.cdiv(rows, 2), sub)
    vmem_limit = int(min(phys, max(tr * per_row + (4 << 20), 32 << 20)))
    return tr, vmem_limit


def _linear_tiles(rows, d_in, d_out, x_dtype, w_dtype, out_dtype):
    """Pick (tm, tn, tk, vmem_limit) for the standalone Linear kernel."""
    phys = _vmem_phys_bytes()
    sub = _sublane(x_dtype)
    x_sz = jnp.dtype(x_dtype).itemsize
    w_sz = jnp.dtype(w_dtype).itemsize
    o_sz = jnp.dtype(out_dtype).itemsize
    tn = _col_tile(d_out)
    tk = _col_tile(d_in)
    target = min(phys // 2, 48 << 20)
    fixed = 2 * tk * tn * w_sz + 2 * tn * 4                     # W bufs + bias
    per_row = 2 * tk * x_sz + 2 * tn * o_sz + tn * 4            # x bufs, out bufs, f32 acc
    avail = max(target - fixed, 1 << 20)
    tm_cap = max(avail // per_row, sub)
    want = 512 if x_sz >= 4 else 1024
    tm = min(want, tm_cap)
    tm = min(_round_up(tm, sub), _round_up(rows, sub))
    work = fixed + tm * per_row
    vmem_limit = int(min(phys, max(work + (4 << 20), 32 << 20)))
    return tm, tn, tk, vmem_limit


# ----------------------- fused LayerNorm + Linear kernel ---------------------
def _prenorm_linear_kernel(x_ref, g_ref, b_ref, w_ref, bias_ref, o_ref, xn_ref):
    # grid = (row_tiles, out_col_tiles); the x block index only depends on the
    # row axis, so Pallas does not re-DMA x across j.  LN is computed once per
    # row tile (j == 0) into a matmul-dtype VMEM scratch and reused for every
    # output-column tile.  INVARIANT: grid axis 1 (j) must stay innermost and
    # "arbitrary" for this reuse to be valid.
    @pl.when(pl.program_id(1) == 0)
    def _():
        x = x_ref[...].astype(jnp.float32)                       # (tm, D)
        mean = jnp.mean(x, axis=-1, keepdims=True)
        ex2 = jnp.mean(x * x, axis=-1, keepdims=True)
        var = jnp.maximum(ex2 - mean * mean, 0.0)
        inv = jax.lax.rsqrt(var + LN_EPS)
        # LN math in f32; cast ONCE to the matmul dtype when storing.
        xn_ref[...] = ((x - mean) * inv * g_ref[...] + b_ref[...]
                       ).astype(xn_ref.dtype)

    acc = jnp.dot(xn_ref[...], w_ref[...],
                  preferred_element_type=jnp.float32)            # (tm, tn)
    o_ref[...] = (acc + bias_ref[...].astype(jnp.float32)).astype(o_ref.dtype)


def prenorm_linear_pallas(x, gamma, beta, w, bias):
    """fn(LayerNorm(x)) with fn = Linear(w, b), as one fused Pallas kernel."""
    orig_shape = x.shape
    d_in = orig_shape[-1]
    d_out = w.shape[1]
    x2 = x.reshape(-1, d_in)
    rows = x2.shape[0]

    mm_dtype = w.dtype   # normalized activations are cast to the weight dtype
    tm, tn, vmem_limit = _fused_tiles(rows, d_in, d_out, x.dtype, mm_dtype,
                                      x.dtype)
    grid = (pl.cdiv(rows, tm), d_out // tn)

    out = pl.pallas_call(
        _prenorm_linear_kernel,
        out_shape=jax.ShapeDtypeStruct((rows, d_out), x.dtype),
        grid_spec=pltpu.PrefetchScalarGridSpec(
            num_scalar_prefetch=0,
            grid=grid,
            in_specs=[
                pl.BlockSpec((tm, d_in), lambda i, j: (i, 0)),   # x rows
                pl.BlockSpec((1, d_in), lambda i, j: (0, 0)),    # gamma
                pl.BlockSpec((1, d_in), lambda i, j: (0, 0)),    # beta
                pl.BlockSpec((d_in, tn), lambda i, j: (0, j)),   # W (resident when tn==d_out)
                pl.BlockSpec((1, tn), lambda i, j: (0, j)),      # bias cols
            ],
            out_specs=pl.BlockSpec((tm, tn), lambda i, j: (i, j)),
            scratch_shapes=[pltpu.VMEM((tm, d_in), mm_dtype)],
        ),
        compiler_params=pltpu.CompilerParams(
            dimension_semantics=("parallel", "arbitrary"),
            vmem_limit_bytes=vmem_limit),
    )(x2,
      gamma.reshape(1, d_in).astype(jnp.float32),
      beta.reshape(1, d_in).astype(jnp.float32),
      w,
      bias.reshape(1, d_out))
    return out.reshape(orig_shape[:-1] + (d_out,))


# ----------------------------- LayerNorm kernel ------------------------------
# (used for the generic, non-Linear `fn` path)
def _layernorm_kernel(x_ref, g_ref, b_ref, o_ref):
    x = x_ref[...].astype(jnp.float32)                           # (tr, D)
    mean = jnp.mean(x, axis=-1, keepdims=True)
    ex2 = jnp.mean(x * x, axis=-1, keepdims=True)
    var = jnp.maximum(ex2 - mean * mean, 0.0)
    inv = jax.lax.rsqrt(var + LN_EPS)
    o_ref[...] = ((x - mean) * inv * g_ref[...] + b_ref[...]).astype(o_ref.dtype)


def layernorm_pallas(x, gamma, beta, *, tile_rows=None):
    """LayerNorm over the last axis of x (any leading shape)."""
    orig_shape = x.shape
    dim = orig_shape[-1]
    x2 = x.reshape(-1, dim)
    rows = x2.shape[0]

    tr, vmem_limit = _ln_tiles(rows, dim, x.dtype, tile_rows)
    grid = (pl.cdiv(rows, tr),)   # partial last block handled by Pallas; no pad

    out = pl.pallas_call(
        _layernorm_kernel,
        out_shape=jax.ShapeDtypeStruct((rows, dim), x.dtype),
        grid_spec=pltpu.PrefetchScalarGridSpec(
            num_scalar_prefetch=0,
            grid=grid,
            in_specs=[
                pl.BlockSpec((tr, dim), lambda i: (i, 0)),
                pl.BlockSpec((1, dim), lambda i: (0, 0)),
                pl.BlockSpec((1, dim), lambda i: (0, 0)),
            ],
            out_specs=pl.BlockSpec((tr, dim), lambda i: (i, 0)),
        ),
        compiler_params=pltpu.CompilerParams(
            dimension_semantics=("parallel",),
            vmem_limit_bytes=vmem_limit),
    )(x2,
      gamma.reshape(1, dim).astype(jnp.float32),
      beta.reshape(1, dim).astype(jnp.float32))
    return out.reshape(orig_shape)


# --------------------------- tiled Linear kernel -----------------------------
def _linear_kernel(x_ref, w_ref, b_ref, o_ref, acc_ref):
    @pl.when(pl.program_id(2) == 0)
    def _():
        acc_ref[...] = jnp.zeros_like(acc_ref)

    acc_ref[...] += jnp.dot(x_ref[...], w_ref[...],
                            preferred_element_type=jnp.float32)

    @pl.when(pl.program_id(2) == pl.num_programs(2) - 1)
    def _():
        o_ref[...] = (acc_ref[...] + b_ref[...].astype(jnp.float32)
                      ).astype(o_ref.dtype)


def linear_pallas(x, w, b):
    """y = x @ w + b, x: (..., D_in), w: (D_in, D_out), b: (D_out,)."""
    orig_shape = x.shape
    d_in = orig_shape[-1]
    d_out = w.shape[1]
    x2 = x.reshape(-1, d_in)
    rows = x2.shape[0]

    tm, tn, tk, vmem_limit = _linear_tiles(rows, d_in, d_out, x.dtype, w.dtype,
                                           x.dtype)
    grid = (pl.cdiv(rows, tm), d_out // tn, d_in // tk)

    out = pl.pallas_call(
        _linear_kernel,
        out_shape=jax.ShapeDtypeStruct((rows, d_out), x.dtype),
        grid_spec=pltpu.PrefetchScalarGridSpec(
            num_scalar_prefetch=0,
            grid=grid,
            in_specs=[
                pl.BlockSpec((tm, tk), lambda i, j, k: (i, k)),
                pl.BlockSpec((tk, tn), lambda i, j, k: (k, j)),
                pl.BlockSpec((1, tn), lambda i, j, k: (0, j)),
            ],
            out_specs=pl.BlockSpec((tm, tn), lambda i, j, k: (i, j)),
            scratch_shapes=[pltpu.VMEM((tm, tn), jnp.float32)],
        ),
        compiler_params=pltpu.CompilerParams(
            dimension_semantics=("parallel", "parallel", "arbitrary"),
            vmem_limit_bytes=vmem_limit),
    )(x2, w, b.reshape(1, d_out))
    return out.reshape(orig_shape[:-1] + (d_out,))


# --------------------------------- modules -----------------------------------
class Linear:
    """Simple `fn` for PreNorm: y = x @ w + b (Pallas matmul)."""

    def __init__(self, w, b):
        self.w = w
        self.b = b

    def __call__(self, x, **kwargs):
        return linear_pallas(x, self.w, self.b)


class PreNorm:
    """JAX/Pallas port of the PyTorch PreNorm module: fn(LayerNorm(x)).

    When `fn` is a Linear, LayerNorm is fused into the matmul kernel so the
    normalized activations never round-trip through HBM.  For arbitrary `fn`,
    the standalone LayerNorm kernel is used followed by `fn`.
    """

    def __init__(self, dim, fn):
        self.dim = dim
        self.fn = fn
        # torch.nn.LayerNorm default init: weight=1, bias=0
        self.gamma = jnp.ones((dim,), jnp.float32)
        self.beta = jnp.zeros((dim,), jnp.float32)

    def __call__(self, x, **kwargs):
        if isinstance(self.fn, Linear) and not kwargs:
            return prenorm_linear_pallas(x, self.gamma, self.beta,
                                         self.fn.w, self.fn.b)
        return self.fn(layernorm_pallas(x, self.gamma, self.beta), **kwargs)


if __name__ == "__main__":
    batch, seq, dim = 2, 8, 32
    key = jax.random.PRNGKey(0)
    kx, kw, kb = jax.random.split(key, 3)

    x = jax.random.normal(kx, (batch, seq, dim), dtype=jnp.float32)

    # deterministic params for the wrapped fn (a Linear(dim, dim))
    w = jax.random.normal(kw, (dim, dim), dtype=jnp.float32) * 0.02
    b = jax.random.normal(kb, (dim,), dtype=jnp.float32) * 0.02

    prenorm = PreNorm(dim, Linear(w, b))
    out = jax.block_until_ready(prenorm(x))

    # reference in plain JAX (biased variance, eps inside sqrt = torch LN)
    mean = x.mean(-1, keepdims=True)
    var = ((x - mean) ** 2).mean(-1, keepdims=True)
    xn = (x - mean) / jnp.sqrt(var + LN_EPS)
    ref = xn @ w + b

    assert out.shape == (batch, seq, dim)
    assert jnp.allclose(out, ref, atol=1e-4, rtol=1e-4)

    # also check the generic (non-fused) building blocks
    ln = jax.block_until_ready(layernorm_pallas(x, prenorm.gamma, prenorm.beta))
    assert jnp.allclose(ln, xn, atol=1e-4, rtol=1e-4)
    lin = jax.block_until_ready(linear_pallas(xn, w, b))
    assert jnp.allclose(lin, ref, atol=1e-4, rtol=1e-4)

    print("KERNEL_OK")
</pallas_src>

<mosaic_0001>
module attributes {stable_mosaic.version = 11 : i64} {
  func.func @_prenorm_linear_kernel(%arg0: i32, %arg1: i32, %arg2: memref<16x32xf32, #tpu.memory_space<vmem>>, %arg3: memref<1x32xf32, #tpu.memory_space<vmem>>, %arg4: memref<1x32xf32, #tpu.memory_space<vmem>>, %arg5: memref<32x32xf32, #tpu.memory_space<vmem>>, %arg6: memref<1x32xf32, #tpu.memory_space<vmem>>, %arg7: memref<16x32xf32, #tpu.memory_space<vmem>>, %arg8: memref<16x32xf32, #tpu.memory_space<vmem>>) attributes {dimension_semantics = [#tpu.dimension_semantics<parallel>, #tpu.dimension_semantics<arbitrary>], iteration_bounds = array<i64: 1, 1>, scalar_prefetch = 0 : i64, scratch_operands = 1 : i64, tpu.core_type = #tpu.core_type<tc>, window_params = [{transform_indices = @transform_0, window_bounds = array<i64: 16, 32>}, {pipeline_mode = #tpu.pipeline_mode<synchronous>, transform_indices = @transform_1, window_bounds = array<i64: 1, 32>}, {pipeline_mode = #tpu.pipeline_mode<synchronous>, transform_indices = @transform_2, window_bounds = array<i64: 1, 32>}, {transform_indices = @transform_3, window_bounds = array<i64: 32, 32>}, {transform_indices = @transform_4, window_bounds = array<i64: 1, 32>}, {transform_indices = @transform_5, window_bounds = array<i64: 16, 32>}]} {
    %c0_i32 = arith.constant 0 : i32
    %0 = arith.cmpi eq, %arg1, %c0_i32 : i32
    %1 = arith.extui %0 : i1 to i32
    %c0_i32_0 = arith.constant 0 : i32
    %2 = arith.cmpi ne, %1, %c0_i32_0 : i32
    scf.if %2 {
      %c0_8 = arith.constant 0 : index
      %c0_9 = arith.constant 0 : index
      %10 = vector.load %arg2[%c0_8, %c0_9] : memref<16x32xf32, #tpu.memory_space<vmem>>, vector<16x32xf32>
      %cst_10 = arith.constant dense<0.000000e+00> : vector<16xf32>
      %11 = vector.multi_reduction <add>, %10, %cst_10 [1] : vector<16x32xf32> to vector<16xf32>
      %12 = vector.shape_cast %11 : vector<16xf32> to vector<16x1xf32>
      %cst_11 = arith.constant 3.200000e+01 : f32
      %13 = vector.broadcast %cst_11 : f32 to vector<16x1xf32>
      %14 = arith.divf %12, %13 : vector<16x1xf32>
      %15 = arith.mulf %10, %10 : vector<16x32xf32>
      %cst_12 = arith.constant dense<0.000000e+00> : vector<16xf32>
      %16 = vector.multi_reduction <add>, %15, %cst_12 [1] : vector<16x32xf32> to vector<16xf32>
      %17 = vector.shape_cast %16 : vector<16xf32> to vector<16x1xf32>
      %cst_13 = arith.constant 3.200000e+01 : f32
      %18 = vector.broadcast %cst_13 : f32 to vector<16x1xf32>
      %19 = arith.divf %17, %18 : vector<16x1xf32>
      %20 = arith.mulf %14, %14 : vector<16x1xf32>
      %21 = arith.subf %19, %20 : vector<16x1xf32>
      %cst_14 = arith.constant 0.000000e+00 : f32
      %22 = vector.broadcast %cst_14 : f32 to vector<16x1xf32>
      %23 = arith.maximumf %21, %22 : vector<16x1xf32>
      %cst_15 = arith.constant 9.99999974E-6 : f32
      %24 = vector.broadcast %cst_15 : f32 to vector<16x1xf32>
      %25 = arith.addf %23, %24 : vector<16x1xf32>
      %26 = math.rsqrt %25 : vector<16x1xf32>
      %27 = vector.broadcast %14 : vector<16x1xf32> to vector<16x32xf32>
      %28 = arith.subf %10, %27 : vector<16x32xf32>
      %29 = vector.broadcast %26 : vector<16x1xf32> to vector<16x32xf32>
      %30 = arith.mulf %28, %29 : vector<16x32xf32>
      %c0_16 = arith.constant 0 : index
      %c0_17 = arith.constant 0 : index
      %31 = vector.load %arg3[%c0_16, %c0_17] : memref<1x32xf32, #tpu.memory_space<vmem>>, vector<1x32xf32>
      %32 = vector.broadcast %31 : vector<1x32xf32> to vector<16x32xf32>
      %33 = arith.mulf %30, %32 : vector<16x32xf32>
      %c0_18 = arith.constant 0 : index
      %c0_19 = arith.constant 0 : index
      %34 = vector.load %arg4[%c0_18, %c0_19] : memref<1x32xf32, #tpu.memory_space<vmem>>, vector<1x32xf32>
      %35 = vector.broadcast %34 : vector<1x32xf32> to vector<16x32xf32>
      %36 = arith.addf %33, %35 : vector<16x32xf32>
      %c0_20 = arith.constant 0 : index
      %c0_21 = arith.constant 0 : index
      %37 = vector.load %arg8[%c0_20, %c0_21] : memref<16x32xf32, #tpu.memory_space<vmem>>, vector<16x32xf32>
      tpu.vector_store %arg8[%c0_20, %c0_21], %36 {strides = array<i32>} : memref<16x32xf32, #tpu.memory_space<vmem>>, vector<16x32xf32>,
    } else {
    }
    %c0 = arith.constant 0 : index
    %c0_1 = arith.constant 0 : index
    %3 = vector.load %arg8[%c0, %c0_1] : memref<16x32xf32, #tpu.memory_space<vmem>>, vector<16x32xf32>
    %c0_2 = arith.constant 0 : index
    %c0_3 = arith.constant 0 : index
    %4 = vector.load %arg5[%c0_2, %c0_3] : memref<32x32xf32, #tpu.memory_space<vmem>>, vector<32x32xf32>
    %cst = arith.constant dense<0.000000e+00> : vector<16x32xf32>
    %5 = tpu.matmul %3, %4, %cst {dimension_numbers = #tpu.dot_dimension_numbers<[1], [0], [0], [1], [0, 0, 1, 1], [], []>} : vector<16x32xf32>, vector<32x32xf32>, vector<16x32xf32> -> vector<16x32xf32>
    %c0_4 = arith.constant 0 : index
    %c0_5 = arith.constant 0 : index
    %6 = vector.load %arg6[%c0_4, %c0_5] : memref<1x32xf32, #tpu.memory_space<vmem>>, vector<1x32xf32>
    %7 = vector.broadcast %6 : vector<1x32xf32> to vector<16x32xf32>
    %8 = arith.addf %5, %7 : vector<16x32xf32>
    %c0_6 = arith.constant 0 : index
    %c0_7 = arith.constant 0 : index
    %9 = vector.load %arg7[%c0_6, %c0_7] : memref<16x32xf32, #tpu.memory_space<vmem>>, vector<16x32xf32>
    tpu.vector_store %arg7[%c0_6, %c0_7], %8 {strides = array<i32>} : memref<16x32xf32, #tpu.memory_space<vmem>>, vector<16x32xf32>,
    return
  }
  func.func @transform_0(%arg0: i32, %arg1: i32) -> (i32, i32) {
    %c0_i32 = arith.constant 0 : i32
    %c0_i32_0 = arith.constant 0 : i32
    return %arg0, %c0_i32 : i32, i32
  }
  func.func @transform_1(%arg0: i32, %arg1: i32) -> (i32, i32) {
    %c0_i32 = arith.constant 0 : i32
    %c0_i32_0 = arith.constant 0 : i32
    %c0_i32_1 = arith.constant 0 : i32
    return %c0_i32, %c0_i32_0 : i32, i32
  }
  func.func @transform_2(%arg0: i32, %arg1: i32) -> (i32, i32) {
    %c0_i32 = arith.constant 0 : i32
    %c0_i32_0 = arith.constant 0 : i32
    %c0_i32_1 = arith.constant 0 : i32
    return %c0_i32, %c0_i32_0 : i32, i32
  }
  func.func @transform_3(%arg0: i32, %arg1: i32) -> (i32, i32) {
    %c0_i32 = arith.constant 0 : i32
    %c0_i32_0 = arith.constant 0 : i32
    return %c0_i32, %arg1 : i32, i32
  }
  func.func @transform_4(%arg0: i32, %arg1: i32) -> (i32, i32) {
    %c0_i32 = arith.constant 0 : i32
    %c0_i32_0 = arith.constant 0 : i32
    return %c0_i32, %arg1 : i32, i32
  }
  func.func @transform_5(%arg0: i32, %arg1: i32) -> (i32, i32) {
    %c0_i32 = arith.constant 0 : i32
    return %arg0, %arg1 : i32, i32
  }
}

</mosaic_0001>

<llo_original>
// kernel: tpu_custom_call.1
$region0: #{tpu_custom_call.1}
  #allocation0 [shape = 'u32[]', space=smem, size = 0x4, offset = 0x4, fixed_abs, tag = 'smem constant byte address 0x4 - core index']
  #allocation1 [shape = 'u32[72,128]{1,0:T(1,128)}', space=vmem, size = 0x9000, scoped, tag = 'internal scratch']
  #allocation2 [shape = 'f32[16,32]{1,0:T(8,128)}', space=vmem, size = 0x2000, scoped, tag = 'scratch operand']
  %s0 = inlined_call_operand.hbm [shape: f32[16,32], index: 0, kind: input, shape index: {}]
  %s1 = inlined_call_operand.hbm [shape: f32[1,32], index: 1, kind: input, shape index: {}]
  %s2 = inlined_call_operand.vmem [shape: f32[1,32], index: 2, kind: input, shape index: {}]
  %s3 = inlined_call_operand.hbm [shape: f32[32,32], index: 3, kind: input, shape index: {}]
  %s4 = inlined_call_operand.vmem [shape: f32[1,32], index: 4, kind: input, shape index: {}]
  %s5 = inlined_call_operand.hbm [shape: f32[16,32], index: 5, kind: output, shape index: {}]
  %s6 = sld [smem:[#allocation0]]
  $region46: #{tpu_custom_call.1} parent=0
    _
  %s8 = ssub.s32 1, %s6
  %s9 = scalar_select 0, %s8, %s6
  $region1: #{tpu_custom_call.1} parent=0
    #allocation3 [shape = 'u8[8192]{0}', space=vmem, size = 0x2000, scoped, tag = 'input window, operand 0, single buffered']
    #allocation4 [shape = 's32[1]{0}', space=sflag, size = 0x4, scoped, tag = 'scoped memory for tpu_custom_call.1']
    #allocation5 [shape = 's32[1]{0}', space=sflag, size = 0x4, scoped, tag = 'scoped memory for tpu_custom_call.1']
    #allocation6 [shape = 'u8[512]{0}', space=vmem, size = 0x400, scoped, tag = 'input window, operand 1, single buffered']
    #allocation7 [shape = 's32[1]{0}', space=sflag, size = 0x4, scoped, tag = 'scoped memory for tpu_custom_call.1']
    #allocation8 [shape = 'u8[16384]{0}', space=vmem, size = 0x4000, scoped, tag = 'input window, operand 3, single buffered']
    #allocation9 [shape = 'u8[8192]{0}', space=vmem, size = 0x2000, scoped, tag = 'output window, operand 0, single buffered']
    %10 = vsyncpa [#allocation4], 0
    %11 = vsyncpa [#allocation7], 0
    %12 = vsyncpa [#allocation5], 0
    // Predicated region
    $region2: #{tpu_custom_call.1} parent=1 // pred_check
      _
    $region3: #{tpu_custom_call.1} parent=1 // pred_check_branch
      %14 = sbr.rel (0) target = $region5
    $region4: #{tpu_custom_call.1} parent=1 // pred_region
      %16 = vsyncadd [#allocation4], 0
      %s17 = sshll.u32 %s0, 4
      %s18 = int_to_ptr.hbm [resolvable:$true] %s17
      %s19 = sshll.u32 [#allocation3], 4
      %s20 = int_to_ptr.vmem [resolvable:$true] %s19
      %25 = dma.hbm_to_vmem [thread:$0]  %s18, 256, %s20, [#allocation4], 128, 128, 8
    $region5: #{tpu_custom_call.1} parent=1 // pred_fallthru
      _
    // Predicated region
    $region6: #{tpu_custom_call.1} parent=1 // pred_check
      _
    $region7: #{tpu_custom_call.1} parent=1 // pred_check_branch
      %27 = sbr.rel (0) target = $region9
    $region8: #{tpu_custom_call.1} parent=1 // pred_region
      %29 = vsyncadd [#allocation7], 0
      %s31 = sshll.u32 %s1, 4
      %s32 = int_to_ptr.hbm [resolvable:$true] %s31
      %s33 = sshll.u32 [#allocation6], 4
      %s34 = int_to_ptr.vmem [resolvable:$true] %s33
      %36 = dma.hbm_to_vmem [thread:$0]  %s32, 16, %s34, [#allocation7]
    $region9: #{tpu_custom_call.1} parent=1 // pred_fallthru
      _
    // Predicated region
    $region10: #{tpu_custom_call.1} parent=1 // pred_check
      _
    $region11: #{tpu_custom_call.1} parent=1 // pred_check_branch
      %38 = sbr.rel (0) target = $region13
    $region12: #{tpu_custom_call.1} parent=1 // pred_region
      _
    $region13: #{tpu_custom_call.1} parent=1 // pred_fallthru
      _
    // Predicated region
    $region14: #{tpu_custom_call.1} parent=1 // pred_check
      _
    $region15: #{tpu_custom_call.1} parent=1 // pred_check_branch
      %40 = sbr.rel (0) target = $region17
    $region16: #{tpu_custom_call.1} parent=1 // pred_region
      %42 = vsyncadd [#allocation7], 0
      %s43 = sshll.u32 %s3, 4
      %s44 = int_to_ptr.hbm [resolvable:$true] %s43
      %s45 = sshll.u32 [#allocation8], 4
      %s46 = int_to_ptr.vmem [resolvable:$true] %s45
      %51 = dma.hbm_to_vmem [thread:$0]  %s44, 512, %s46, [#allocation7], 128, 128, 8
    $region17: #{tpu_custom_call.1} parent=1 // pred_fallthru
      _
    // Predicated region
    $region18: #{tpu_custom_call.1} parent=1 // pred_check
      _
    $region19: #{tpu_custom_call.1} parent=1 // pred_check_branch
      %53 = sbr.rel (0) target = $region21
    $region20: #{tpu_custom_call.1} parent=1 // pred_region
      _
    $region21: #{tpu_custom_call.1} parent=1 // pred_fallthru
      _
    // Predicated region
    $region22: #{tpu_custom_call.1} parent=1 // pred_check
      _
    $region23: #{tpu_custom_call.1} parent=1 // pred_check_branch
      %55 = sbr.rel (0) target = $region25
    $region24: #{tpu_custom_call.1} parent=1 // pred_region
      %57 = dma.done [#allocation4], 256
    $region25: #{tpu_custom_call.1} parent=1 // pred_fallthru
      _
    // Predicated region
    $region26: #{tpu_custom_call.1} parent=1 // pred_check
      _
    $region27: #{tpu_custom_call.1} parent=1 // pred_check_branch
      %59 = sbr.rel (0) target = $region29
    $region28: #{tpu_custom_call.1} parent=1 // pred_region
      %61 = dma.done [#allocation7], 16
    $region29: #{tpu_custom_call.1} parent=1 // pred_fallthru
      _
    // Predicated region
    $region30: #{tpu_custom_call.1} parent=1 // pred_check
      _
    $region31: #{tpu_custom_call.1} parent=1 // pred_check_branch
      %63 = sbr.rel (0) target = $region33
    $region32: #{tpu_custom_call.1} parent=1 // pred_region
      %65 = dma.done [#allocation7], 512
    $region33: #{tpu_custom_call.1} parent=1 // pred_fallthru
      _
    %p66 = scmp.eq.s32.totalorder 0, 0
    // Predicated region
    $region34: #{tpu_custom_call.1} parent=1 // pred_check
      %p67 = pneg %p66
    $region35: #{tpu_custom_call.1} parent=1 // pred_check_branch
      %69 = sbr.rel (%p67) target = $region37
    $region36: #{tpu_custom_call.1} parent=1 // pred_region
      %v70 = vld [vmem:[#allocation3] sm:$0xff]
      %v71 = vld [vmem:[#allocation3 + $0x8] sm:$0xff]
      %vm72 = vcmask 261120
      %v73 = vsel %vm72, %v70, 0.0
      %74 = vadd.xlane.f32.xlu0 %v73
      %v75 = vpop.xlane.xlu0 %74
      %v76 = vsel %vm72, %v71, 0.0
      %77 = vadd.xlane.f32.xlu0 %v76
      %v78 = vpop.xlane.xlu0 %77
      %v79 = vrcp.pop 32.0
      %v80 = vmul.f32 32.0, %v79
      %v81 = vsub.f32 1.0, %v80
      %v82 = vmul.f32 %v79, %v81
      %v83 = vadd.f32 %v79, %v82
      %vm84 = vweird.f32 %v79
      %v85 = vsel %vm84, %v79, %v83
      %v86 = vmul.f32 %v75, %v85
      %v87 = vmul.f32 %v78, %v85
      %v88 = vmul.f32 %v70, %v70
      %v89 = vmul.f32 %v71, %v71
      %v90 = vsel %vm72, %v88, 0.0
      %91 = vadd.xlane.f32.xlu0 %v90
      %v92 = vpop.xlane.xlu0 %91
      %v93 = vsel %vm72, %v89, 0.0
      %94 = vadd.xlane.f32.xlu0 %v93
      %v95 = vpop.xlane.xlu0 %94
      %v96 = vmul.f32 %v92, %v85
      %v97 = vmul.f32 %v95, %v85
      %v98 = vmul.f32 %v86, %v86
      %v99 = vmul.f32 %v87, %v87
      %v100 = vsub.f32 %v96, %v98
      %v101 = vsub.f32 %v97, %v99
      %v102 = vmax.f32 %v100, 0.0
      %v103 = vmax.f32 %v101, 0.0
      %v104 = vadd.f32 %v102, 1e-05
      %v105 = vadd.f32 %v103, 1e-05
      %v106 = vrsqrt.pop %v104
      %v107 = vmul.f32 %v106, %v104
      %v108 = vmul.f32 %v107, %v106
      %v109 = vmul.f32 0.5, %v108
      %v110 = vsub.f32 1.5, %v109
      %v111 = vmul.f32 %v106, %v110
      %vm112 = vweird.f32 %v104
      %vm113 = vweird.f32 %v106
      %vm114 = vmor %vm112, %vm113
      %v115 = vsel %vm114, %v106, %v111
      %v116 = vrsqrt.pop %v105
      %v117 = vmul.f32 %v116, %v105
      %v118 = vmul.f32 %v117, %v116
      %v119 = vmul.f32 0.5, %v118
      %v120 = vsub.f32 1.5, %v119
      %v121 = vmul.f32 %v116, %v120
      %vm122 = vweird.f32 %v105
      %vm123 = vweird.f32 %v116
      %vm124 = vmor %vm122, %vm123
      %v125 = vsel %vm124, %v116, %v121
      %v126 = vsub.f32 %v70, %v86
      %v127 = vsub.f32 %v71, %v87
      %v128 = vmul.f32 %v126, %v115
      %v129 = vmul.f32 %v127, %v125
      %v130 = vld [vmem:[#allocation6] sm:$0x1]
      %v132 = vperm.slane %v130, 0
      %v134 = vmul.f32 %v128, %v132
      %v135 = vmul.f32 %v129, %v132
      %v136 = vld [vmem:[%s2] sm:$0x1]
      %v138 = vperm.slane %v136, 0
      %v140 = vadd.f32 %v134, %v138
      %v141 = vadd.f32 %v135, %v138
      %142 = vst.msk [vmem:[#allocation2] sm:$0xff] %vm72, %v140
      %143 = vst.msk [vmem:[#allocation2 + $0x8] sm:$0xff] %vm72, %v141
    $region37: #{tpu_custom_call.1} parent=1 // pred_fallthru
      _
    %v144 = vld [vmem:[#allocation2] sm:$0xff]
    %v145 = vld [vmem:[#allocation2 + $0x8] sm:$0xff]
    %v146 = vld [vmem:[#allocation8] sm:$0xff]
    %v147 = vld [vmem:[#allocation8 + $0x8] sm:$0xff]
    %v148 = vld [vmem:[#allocation8 + $0x10] sm:$0xff]
    %v149 = vld [vmem:[#allocation8 + $0x18] sm:$0xff]
    %v150 = vld [vmem:[%s4] sm:$0x1]
    %v152 = vperm.slane %v150, 0
    %vm154 = vcmask 261120
    %v156 = vsel %vm154, %v144, 0
    %v159 = vsel %vm154, %v145, 0
    %161 = vmatpush.msra.mxu0 0.0
    %162 = vmatpush.msra.mxu0 0.0
    %163 = vmatpush.msra.mxu0 0.0
    %164 = vmatpush.msra.mxu0 0.0
    %165 = vmatpush.msra.mxu0 0.0
    %166 = vmatpush.msra.mxu0 0.0
    %167 = vmatpush.msra.mxu0 0.0
    %168 = vmatpush.msra.mxu0 0.0
    %169 = vmatpush.msra.mxu0 0.0
    %170 = vmatpush.msra.mxu0 0.0
    %171 = vmatpush.msra.mxu0 0.0
    %172 = vmatpush.msra.mxu0 0.0
    %173 = vmatpush.msra.mxu0 %v149
    %174 = vmatpush.msra.mxu0 %v148
    %175 = vmatpush.msra.mxu0 %v147
    %176 = vmatpush.msra.mxu0 %v146
    %177 = vmatmul.f32.gmra.mxu0 %v156
    %v178 = vpop.f32.mrf.mxu0
    %v179 = vadd.f32 %v152, %v178
    %180 = vmatmul.f32.gmra.mxu0 %v159
    %v181 = vpop.f32.mrf.mxu0
    %v182 = vadd.f32 %v152, %v181
    %183 = vdwg.mxu0
    %184 = vst.msk [vmem:[#allocation9] sm:$0xff] %vm154, %v179
    %185 = vst.msk [vmem:[#allocation9 + $0x8] sm:$0xff] %vm154, %v182
    // Predicated region
    $region38: #{tpu_custom_call.1} parent=1 // pred_check
      _
    $region39: #{tpu_custom_call.1} parent=1 // pred_check_branch
      %187 = sbr.rel (0) target = $region41
    $region40: #{tpu_custom_call.1} parent=1 // pred_region
      %189 = vsyncadd [#allocation5], 0
      %s190 = sshll.u32 [#allocation9], 4
      %s191 = int_to_ptr.vmem [resolvable:$true] %s190
      %s192 = sshll.u32 %s5, 4
      %s193 = int_to_ptr.hbm [resolvable:$true] %s192
      %198 = dma.vmem_to_hbm [thread:$0]  %s191, 256, %s193, [#allocation5], 128, 128, 8
    $region41: #{tpu_custom_call.1} parent=1 // pred_fallthru
      _
    // Predicated region
    $region42: #{tpu_custom_call.1} parent=1 // pred_check
      _
    $region43: #{tpu_custom_call.1} parent=1 // pred_check_branch
      %200 = sbr.rel (0) target = $region45
    $region44: #{tpu_custom_call.1} parent=1 // pred_region
      %202 = dma.done [#allocation5], 256
    $region45: #{tpu_custom_call.1} parent=1 // pred_fallthru
      _
    %203 = vsyncpa [#allocation4], 1
    %204 = vsyncpa [#allocation7], 1
    %205 = vsyncpa [#allocation5], 1

</llo_original>
